<compile_context>
chip_gen: v7x
topology: tpu7x:2x2x1
jax: 0.10.0
libtpu: 0.0.40
codegen_flags: <defaults>
</compile_context>

<pallas_src>
import jax
import jax.numpy as jnp
import numpy as np
from jax import lax
from jax.experimental import pallas as pl
from jax.experimental.pallas import tpu as pltpu

PADL = 128  # lanes per pooling-parity half (one full lane vreg)


def _convpool_kernel(x_ref, t_ref, b_ref, out_ref, im2_ref):
    """Fused valid KHxKW conv (one banded MXU matmul) + bias + 2x2 max-pool.

    x_ref  : (R_IN, W*Cin)       input rows, row = n*H + h, zero-padded to a sublane multiple
    t_ref  : (KH*W*Cin, 2*PADL)  banded conv weights; conv column (wo, co) is routed to lane
                                 (wo % 2)*PADL + (wo // 2)*Cout + co
    b_ref  : (1, 2*PADL)         conv bias in the same column layout (zeros in padding lanes)
    out_ref: (N*H//2, PADL)      pooled rows, row = n*(H//2) + q; rows q >= HP and lanes
                                 >= WP*Cout are junk and stripped by the wrapper
    im2_ref: (N*H, KH*W*Cin)     VMEM scratch for the H-direction im2col (built once)
    """
    nr, k_tot = im2_ref.shape
    wc = x_ref.shape[1]
    kh = k_tot // wc

    # ---- im2col along H, done ONCE: chunk dy holds the input rows shifted down by dy ----
    for dy in range(kh):
        im2_ref[:, dy * wc:(dy + 1) * wc] = x_ref[dy:dy + nr, :]

    # ---- conv + bias: a single MXU matmul with K = KH*W*Cin, 256 output lanes ----
    acc = jnp.dot(im2_ref[...], t_ref[...], preferred_element_type=jnp.float32)
    acc = acc + b_ref[...]                                       # broadcast bias add

    # ---- MaxPool2d(2), W direction: even/odd conv columns live in the two aligned
    #      128-lane halves -> one vreg-aligned maximum ----
    padl = acc.shape[1] // 2
    wmax = jnp.maximum(acc[:, :padl], acc[:, padl:])             # (N*H, PADL)

    # ---- MaxPool2d(2), H direction: adjacent rows; row count is a multiple of 8 so the
    #      pairing reshape is tile-aligned and the store is unmasked ----
    hpair = wmax.reshape(nr // 2, 2, padl)
    out_ref[...] = jnp.maximum(hpair[:, 0, :], hpair[:, 1, :])   # (N*H//2, PADL)


def make_test_net(w_oihw, bias, *, input_hw):
    """Build the jitted forward for Conv2d(Cin,Cout,K,1,pad=0) -> MaxPool2d(2).

    All parameter reshaping (banded Toeplitz weights, routed bias) is done HERE, once,
    in numpy, so the per-call forward path contains only the input relayout and the
    Pallas kernel.
    """
    H, W = input_hw
    w_np = np.asarray(w_oihw, np.float32)          # (Cout, Cin, KH, KW), PyTorch OIHW
    b_np = np.asarray(bias, np.float32)            # (Cout,)
    Cout, Cin, KH, KW = w_np.shape
    HO, WO = H - KH + 1, W - KW + 1                # valid conv output
    # TODO(synk): PyTorch MaxPool2d(2) floor-pools odd conv outputs; this fused path
    # assumes even conv output dims (true for the 16x16 test input).
    assert HO % 2 == 0 and WO % 2 == 0 and H % 2 == 0
    HP, WP = HO // 2, WO // 2
    assert PADL % Cout == 0 and WP * Cout <= PADL
    blk = PADL // Cout
    assert WO <= 2 * blk
    WC = W * Cin
    K = KH * WC                                    # 144 for this module/input

    # Banded conv weights: T[dy*W*Cin + w_in*Cin + ci, col(wo, co)] = w[co, ci, dy, w_in - wo]
    # with col(wo, co) = (wo % 2)*PADL + (wo // 2)*Cout + co.
    T = np.zeros((K, 2 * PADL), np.float32)
    for dy in range(KH):
        for dx in range(KW):
            for wo in range(WO):
                k0 = dy * WC + (wo + dx) * Cin
                c0 = (wo % 2) * PADL + (wo // 2) * Cout
                T[k0:k0 + Cin, c0:c0 + Cout] = w_np[:, :, dy, dx].T     # (Cin, Cout)

    # Conv bias routed to the same columns (zeros in the padding lanes).
    B = np.zeros((1, 2 * PADL), np.float32)
    for wo in range(WO):
        c0 = (wo % 2) * PADL + (wo // 2) * Cout
        B[0, c0:c0 + Cout] = b_np

    t_dev = jnp.asarray(T)                         # device-resident, built once
    b_dev = jnp.asarray(B)

    @jax.jit
    def forward(x_nchw):
        assert x_nchw.shape[1:] == (Cin, H, W)
        N = x_nchw.shape[0]
        NR = N * H
        R_IN = -(-(NR + KH - 1) // 8) * 8          # window overhang rows, 8-aligned

        # NCHW -> flat conv rows (row = n*H + h, column = w*Cin + ci), zero row padding.
        x_rows = jnp.transpose(x_nchw, (0, 2, 3, 1)).astype(jnp.float32).reshape(NR, WC)
        x_rows = jnp.pad(x_rows, ((0, R_IN - NR), (0, 0)))

        out = pl.pallas_call(
            _convpool_kernel,
            out_shape=jax.ShapeDtypeStruct((NR // 2, PADL), jnp.float32),
            scratch_shapes=[pltpu.VMEM((NR, K), jnp.float32)],
        )(x_rows, t_dev, b_dev)

        # Strip junk rows (H-window overhang) and padding lanes, back to NCHW.
        out = out.reshape(N, H // 2, PADL)[:, :HP, :WP * Cout]
        return jnp.transpose(out.reshape(N, HP, WP, Cout), (0, 3, 1, 2))

    return forward


def _reference(x_nchw, w_oihw, bias):
    """Pure-JAX reference: Conv2d(3,16,3,stride=1,padding=0) + bias, then MaxPool2d(2)."""
    y = lax.conv_general_dilated(
        x_nchw, w_oihw, window_strides=(1, 1), padding="VALID",
        dimension_numbers=("NCHW", "OIHW", "NCHW"))
    y = y + bias[None, :, None, None]
    return lax.reduce_window(y, -jnp.inf, lax.max,
                             window_dimensions=(1, 1, 2, 2),
                             window_strides=(1, 1, 2, 2), padding="VALID")


if __name__ == "__main__":
    # Shapes implied by the module: Conv2d(3, 16, 3, 1) -> input channels = 3.
    N, Cin, H, W = 2, 3, 16, 16
    Cout, KSZ = 16, 3

    key = jax.random.PRNGKey(0)
    kx, kw, kb = jax.random.split(key, 3)
    x = jax.random.normal(kx, (N, Cin, H, W), dtype=jnp.float32)
    w = jax.random.normal(kw, (Cout, Cin, KSZ, KSZ), dtype=jnp.float32) * 0.1   # OIHW
    b = jax.random.normal(kb, (Cout,), dtype=jnp.float32) * 0.1

    forward = make_test_net(w, b, input_hw=(H, W))      # banded weights built once here
    out = jax.block_until_ready(forward(x))             # (2, 16, 7, 7)
    ref = jax.block_until_ready(_reference(x, w, b))

    np.testing.assert_allclose(np.asarray(out), np.asarray(ref), rtol=1e-3, atol=1e-3)
    print("KERNEL_OK")
</pallas_src>

<mosaic_0001>
module attributes {stable_mosaic.version = 11 : i64} {
  func.func @_convpool_kernel(%arg0: memref<40x48xf32, #tpu.memory_space<vmem>>, %arg1: memref<144x256xf32, #tpu.memory_space<vmem>>, %arg2: memref<1x256xf32, #tpu.memory_space<vmem>>, %arg3: memref<16x128xf32, #tpu.memory_space<vmem>>, %arg4: memref<32x144xf32, #tpu.memory_space<vmem>>) attributes {dimension_semantics = [], scalar_prefetch = 0 : i64, scratch_operands = 1 : i64, tpu.core_type = #tpu.core_type<tc>} {
    %c0 = arith.constant 0 : index
    %c0_0 = arith.constant 0 : index
    %0 = vector.load %arg0[%c0, %c0_0] : memref<40x48xf32, #tpu.memory_space<vmem>>, vector<32x48xf32>
    %c0_1 = arith.constant 0 : index
    %c0_2 = arith.constant 0 : index
    %1 = vector.load %arg4[%c0_1, %c0_2] : memref<32x144xf32, #tpu.memory_space<vmem>>, vector<32x48xf32>
    tpu.vector_store %arg4[%c0_1, %c0_2], %0 {strides = array<i32>} : memref<32x144xf32, #tpu.memory_space<vmem>>, vector<32x48xf32>,
    %c1 = arith.constant 1 : index
    %c0_3 = arith.constant 0 : index
    %2 = vector.load %arg0[%c1, %c0_3] : memref<40x48xf32, #tpu.memory_space<vmem>>, vector<32x48xf32>
    %c0_4 = arith.constant 0 : index
    %c48 = arith.constant 48 : index
    %3 = vector.load %arg4[%c0_4, %c48] : memref<32x144xf32, #tpu.memory_space<vmem>>, vector<32x48xf32>
    tpu.vector_store %arg4[%c0_4, %c48], %2 {strides = array<i32>} : memref<32x144xf32, #tpu.memory_space<vmem>>, vector<32x48xf32>,
    %c2 = arith.constant 2 : index
    %c0_5 = arith.constant 0 : index
    %4 = vector.load %arg0[%c2, %c0_5] : memref<40x48xf32, #tpu.memory_space<vmem>>, vector<32x48xf32>
    %c0_6 = arith.constant 0 : index
    %c96 = arith.constant 96 : index
    %5 = vector.load %arg4[%c0_6, %c96] : memref<32x144xf32, #tpu.memory_space<vmem>>, vector<32x48xf32>
    tpu.vector_store %arg4[%c0_6, %c96], %4 {strides = array<i32>} : memref<32x144xf32, #tpu.memory_space<vmem>>, vector<32x48xf32>,
    %c0_7 = arith.constant 0 : index
    %c0_8 = arith.constant 0 : index
    %6 = vector.load %arg4[%c0_7, %c0_8] : memref<32x144xf32, #tpu.memory_space<vmem>>, vector<32x144xf32>
    %c0_9 = arith.constant 0 : index
    %c0_10 = arith.constant 0 : index
    %7 = vector.load %arg1[%c0_9, %c0_10] : memref<144x256xf32, #tpu.memory_space<vmem>>, vector<144x256xf32>
    %cst = arith.constant dense<0.000000e+00> : vector<32x256xf32>
    %8 = tpu.matmul %6, %7, %cst {dimension_numbers = #tpu.dot_dimension_numbers<[1], [0], [0], [1], [0, 0, 1, 1], [], []>} : vector<32x144xf32>, vector<144x256xf32>, vector<32x256xf32> -> vector<32x256xf32>
    %c0_11 = arith.constant 0 : index
    %c0_12 = arith.constant 0 : index
    %9 = vector.load %arg2[%c0_11, %c0_12] : memref<1x256xf32, #tpu.memory_space<vmem>>, vector<1x256xf32>
    %10 = vector.broadcast %9 : vector<1x256xf32> to vector<32x256xf32>
    %11 = arith.addf %8, %10 : vector<32x256xf32>
    %12 = vector.extract_strided_slice %11 {offsets = [0, 0], sizes = [32, 128], strides = [1, 1]} : vector<32x256xf32> to vector<32x128xf32>
    %13 = vector.extract_strided_slice %11 {offsets = [0, 128], sizes = [32, 128], strides = [1, 1]} : vector<32x256xf32> to vector<32x128xf32>
    %14 = arith.maximumf %12, %13 : vector<32x128xf32>
    %15 = vector.shape_cast %14 : vector<32x128xf32> to vector<16x2x128xf32>
    %16 = vector.extract_strided_slice %15 {offsets = [0, 0, 0], sizes = [16, 1, 128], strides = [1, 1, 1]} : vector<16x2x128xf32> to vector<16x1x128xf32>
    %17 = vector.shape_cast %16 : vector<16x1x128xf32> to vector<16x128xf32>
    %18 = vector.extract_strided_slice %15 {offsets = [0, 1, 0], sizes = [16, 1, 128], strides = [1, 1, 1]} : vector<16x2x128xf32> to vector<16x1x128xf32>
    %19 = vector.shape_cast %18 : vector<16x1x128xf32> to vector<16x128xf32>
    %20 = arith.maximumf %17, %19 : vector<16x128xf32>
    %c0_13 = arith.constant 0 : index
    %c0_14 = arith.constant 0 : index
    %21 = vector.load %arg3[%c0_13, %c0_14] : memref<16x128xf32, #tpu.memory_space<vmem>>, vector<16x128xf32>
    tpu.vector_store %arg3[%c0_13, %c0_14], %20 {strides = array<i32>} : memref<16x128xf32, #tpu.memory_space<vmem>>, vector<16x128xf32>,
    return
  }
}

</mosaic_0001>

<llo_original>
// kernel: forward.1
$region0: #{forward.1}
  #allocation0 [shape = 'u32[]', space=smem, size = 0x4, offset = 0x4, fixed_abs, tag = 'smem constant byte address 0x4 - core index']
  #allocation1 [shape = 'u32[144,128]{1,0:T(1,128)}', space=vmem, size = 0x12000, scoped, tag = 'internal scratch']
  #allocation2 [shape = 'f32[32,144]{1,0:T(8,128)}', space=vmem, size = 0x8000, scoped, tag = 'scratch operand']
  %s0 = inlined_call_operand.vmem [shape: f32[40,48], index: 0, kind: input, shape index: {}]
  %s1 = inlined_call_operand.vmem [shape: f32[144,256], index: 1, kind: input, shape index: {}]
  %s2 = inlined_call_operand.vmem [shape: f32[1,256], index: 2, kind: input, shape index: {}]
  %s3 = inlined_call_operand.vmem [shape: f32[16,128], index: 3, kind: output, shape index: {}]
  %s4 = sld [smem:[#allocation0]]
  $region22: #{forward.1} parent=0
    _
  %s6 = ssub.s32 1, %s4
  %s7 = scalar_select 0, %s6, %s4
  // Predicated region
  $region2: #{forward.1} parent=0 // pred_check
    _
  $region3: #{forward.1} parent=0 // pred_check_branch
    %9 = sbr.rel (0) target = $region5
  $region4: #{forward.1} parent=0 // pred_region
    _
  $region5: #{forward.1} parent=0 // pred_fallthru
    _
  // Predicated region
  $region6: #{forward.1} parent=0 // pred_check
    _
  $region7: #{forward.1} parent=0 // pred_check_branch
    %11 = sbr.rel (0) target = $region9
  $region8: #{forward.1} parent=0 // pred_region
    _
  $region9: #{forward.1} parent=0 // pred_fallthru
    _
  // Predicated region
  $region10: #{forward.1} parent=0 // pred_check
    _
  $region11: #{forward.1} parent=0 // pred_check_branch
    %13 = sbr.rel (0) target = $region13
  $region12: #{forward.1} parent=0 // pred_region
    _
  $region13: #{forward.1} parent=0 // pred_fallthru
    _
  %v14 = vld [vmem:[%s0] sm:$0xff]
  %v15 = vld [vmem:[%s0 + $0x8] sm:$0xff]
  %v16 = vld [vmem:[%s0 + $0x10] sm:$0xff]
  %v17 = vld [vmem:[%s0 + $0x18] sm:$0xff]
  %vm18 = vcmask 392192
  %19 = vst.msk [vmem:[#allocation2] sm:$0xff] %vm18, %v14
  %20 = vst.msk [vmem:[#allocation2 + $0x10] sm:$0xff] %vm18, %v15
  %21 = vst.msk [vmem:[#allocation2 + $0x20] sm:$0xff] %vm18, %v16
  %22 = vst.msk [vmem:[#allocation2 + $0x30] sm:$0xff] %vm18, %v17
  %v23 = vld [vmem:[%s0 + $0x1] sm:$0xff]
  %v24 = vld [vmem:[%s0 + $0x9] sm:$0xff]
  %v25 = vld [vmem:[%s0 + $0x11] sm:$0xff]
  %v26 = vld [vmem:[%s0 + $0x19] sm:$0xff]
  %31 = vrot.lane.b32.xlu0 %v23, 48
  %v32 = vpop.permute.xlu0 %31
  %33 = vrot.lane.b32.xlu0 %v24, 48
  %v34 = vpop.permute.xlu0 %33
  %35 = vrot.lane.b32.xlu0 %v25, 48
  %v36 = vpop.permute.xlu0 %35
  %37 = vrot.lane.b32.xlu0 %v26, 48
  %v38 = vpop.permute.xlu0 %37
  %vm43 = vcmask 785792
  %44 = vst.msk [vmem:[#allocation2] sm:$0xff] %vm43, %v32
  %45 = vst.msk [vmem:[#allocation2 + $0x10] sm:$0xff] %vm43, %v34
  %46 = vst.msk [vmem:[#allocation2 + $0x20] sm:$0xff] %vm43, %v36
  %47 = vst.msk [vmem:[#allocation2 + $0x30] sm:$0xff] %vm43, %v38
  %v48 = vld [vmem:[%s0 + $0x2] sm:$0xff]
  %v49 = vld [vmem:[%s0 + $0xa] sm:$0xff]
  %v50 = vld [vmem:[%s0 + $0x12] sm:$0xff]
  %v51 = vld [vmem:[%s0 + $0x1a] sm:$0xff]
  %56 = vrot.lane.b32.xlu0 %v48, 96
  %v57 = vpop.permute.xlu0 %56
  %58 = vrot.lane.b32.xlu0 %v49, 96
  %v59 = vpop.permute.xlu0 %58
  %60 = vrot.lane.b32.xlu0 %v50, 96
  %v61 = vpop.permute.xlu0 %60
  %62 = vrot.lane.b32.xlu0 %v51, 96
  %v63 = vpop.permute.xlu0 %62
  %vm68 = vcmask 1048320
  %69 = vst.msk [vmem:[#allocation2] sm:$0xff] %vm68, %v57
  %vm70 = vcmask 130048
  %71 = vst.msk [vmem:[#allocation2 + $0x8] sm:$0xff] %vm70, %v57
  %72 = vst.msk [vmem:[#allocation2 + $0x10] sm:$0xff] %vm68, %v59
  %73 = vst.msk [vmem:[#allocation2 + $0x18] sm:$0xff] %vm70, %v59
  %74 = vst.msk [vmem:[#allocation2 + $0x20] sm:$0xff] %vm68, %v61
  %75 = vst.msk [vmem:[#allocation2 + $0x28] sm:$0xff] %vm70, %v61
  %76 = vst.msk [vmem:[#allocation2 + $0x30] sm:$0xff] %vm68, %v63
  %77 = vst.msk [vmem:[#allocation2 + $0x38] sm:$0xff] %vm70, %v63
  %v78 = vld [vmem:[#allocation2] sm:$0xff]
  %v79 = vld [vmem:[#allocation2 + $0x8] sm:$0xff]
  %v80 = vld [vmem:[#allocation2 + $0x10] sm:$0xff]
  %v81 = vld [vmem:[#allocation2 + $0x18] sm:$0xff]
  %v82 = vld [vmem:[#allocation2 + $0x20] sm:$0xff]
  %v83 = vld [vmem:[#allocation2 + $0x28] sm:$0xff]
  %v84 = vld [vmem:[#allocation2 + $0x30] sm:$0xff]
  %v85 = vld [vmem:[#allocation2 + $0x38] sm:$0xff]
  %v86 = vld [vmem:[%s1] sm:$0xff]
  %v87 = vld [vmem:[%s1 + $0x8] sm:$0xff]
  %v88 = vld [vmem:[%s1 + $0x10] sm:$0xff]
  %v89 = vld [vmem:[%s1 + $0x18] sm:$0xff]
  %v90 = vld [vmem:[%s1 + $0x20] sm:$0xff]
  %v91 = vld [vmem:[%s1 + $0x28] sm:$0xff]
  %v92 = vld [vmem:[%s1 + $0x30] sm:$0xff]
  %v93 = vld [vmem:[%s1 + $0x38] sm:$0xff]
  %v94 = vld [vmem:[%s1 + $0x40] sm:$0xff]
  %v95 = vld [vmem:[%s1 + $0x48] sm:$0xff]
  %v96 = vld [vmem:[%s1 + $0x50] sm:$0xff]
  %v97 = vld [vmem:[%s1 + $0x58] sm:$0xff]
  %v98 = vld [vmem:[%s1 + $0x60] sm:$0xff]
  %v99 = vld [vmem:[%s1 + $0x68] sm:$0xff]
  %v100 = vld [vmem:[%s1 + $0x70] sm:$0xff]
  %v101 = vld [vmem:[%s1 + $0x78] sm:$0xff]
  %v102 = vld [vmem:[%s1 + $0x80] sm:$0xff]
  %v103 = vld [vmem:[%s1 + $0x88] sm:$0xff]
  %v104 = vld [vmem:[%s1 + $0x90] sm:$0xff]
  %v105 = vld [vmem:[%s1 + $0x98] sm:$0xff]
  %v106 = vld [vmem:[%s1 + $0xa0] sm:$0xff]
  %v107 = vld [vmem:[%s1 + $0xa8] sm:$0xff]
  %v108 = vld [vmem:[%s1 + $0xb0] sm:$0xff]
  %v109 = vld [vmem:[%s1 + $0xb8] sm:$0xff]
  %v110 = vld [vmem:[%s1 + $0xc0] sm:$0xff]
  %v111 = vld [vmem:[%s1 + $0xc8] sm:$0xff]
  %v112 = vld [vmem:[%s1 + $0xd0] sm:$0xff]
  %v113 = vld [vmem:[%s1 + $0xd8] sm:$0xff]
  %v114 = vld [vmem:[%s1 + $0xe0] sm:$0xff]
  %v115 = vld [vmem:[%s1 + $0xe8] sm:$0xff]
  %v116 = vld [vmem:[%s1 + $0xf0] sm:$0xff]
  %v117 = vld [vmem:[%s1 + $0xf8] sm:$0xff]
  %v118 = vld [vmem:[%s1 + $0x100] sm:$0xff]
  %v119 = vld [vmem:[%s1 + $0x108] sm:$0xff]
  %v120 = vld [vmem:[%s1 + $0x110] sm:$0xff]
  %v121 = vld [vmem:[%s1 + $0x118] sm:$0xff]
  %v122 = vld [vmem:[%s2] sm:$0x3]
  %v124 = vlaneseq
  %v125 = vshrl.u32 %v124, 7
  %v126 = vsub.s32 0, %v125
  %v127 = vrot.slane %v122, %v126
  %v128 = vlaneseq
  %v129 = vshrl.u32 %v128, 7
  %v130 = vsub.s32 1, %v129
  %v131 = vrot.slane %v122, %v130
  %v135 = vsel %vm70, %v79, 0
  %v138 = vsel %vm70, %v81, 0
  %v141 = vsel %vm70, %v83, 0
  %v144 = vsel %vm70, %v85, 0
  %146 = vmatprep.subr.mxu0 %v87
  %147 = vmatpush1.msra.mxu0 %v86
  %148 = vmatprep.subr.mxu0 %v89
  %149 = vmatpush1.msra.mxu0 %v88
  %150 = vmatprep.subr.mxu0 %v91
  %151 = vmatpush1.msra.mxu0 %v90
  %152 = vmatprep.subr.mxu0 %v93
  %153 = vmatpush1.msra.mxu0 %v92
  %154 = vmatprep.subr.mxu0 %v95
  %155 = vmatpush1.msra.mxu0 %v94
  %156 = vmatprep.subr.mxu0 %v97
  %157 = vmatpush1.msra.mxu0 %v96
  %158 = vmatprep.subr.mxu0 %v99
  %159 = vmatpush1.msra.mxu0 %v98
  %160 = vmatprep.subr.mxu0 %v101
  %161 = vmatpush1.msra.mxu0 %v100
  %162 = vmatprep.subr.mxu0 %v103
  %163 = vmatpush1.msra.mxu0 %v102
  %164 = vmatprep.subr.mxu0 %v105
  %165 = vmatpush1.msra.mxu0 %v104
  %166 = vmatprep.subr.mxu0 %v107
  %167 = vmatpush1.msra.mxu0 %v106
  %168 = vmatprep.subr.mxu0 %v109
  %169 = vmatpush1.msra.mxu0 %v108
  %170 = vmatprep.subr.mxu0 %v111
  %171 = vmatpush1.msra.mxu0 %v110
  %172 = vmatprep.subr.mxu0 %v113
  %173 = vmatpush1.msra.mxu0 %v112
  %174 = vmatprep.subr.mxu0 %v115
  %175 = vmatpush1.msra.mxu0 %v114
  %176 = vmatprep.subr.mxu0 %v117
  %177 = vmatpush1.msra.mxu0 %v116
  %178 = vmatprep.subr.mxu0 %v119
  %179 = vmatpush1.msra.mxu0 %v118
  %180 = vmatprep.subr.mxu0 %v121
  %181 = vmatpush1.msra.mxu0 %v120
  %182 = vmatprep.subr.mxu0 0.0
  %183 = vmatpush1.msra.mxu0 0.0
  %184 = vmatprep.subr.mxu0 0.0
  %185 = vmatpush1.msra.mxu0 0.0
  %186 = vmatprep.subr.mxu0 0.0
  %187 = vmatpush1.msra.mxu0 0.0
  %188 = vmatprep.subr.mxu0 0.0
  %189 = vmatpush1.msra.mxu0 0.0
  %190 = vmatprep.subr.mxu0 0.0
  %191 = vmatpush1.msra.mxu0 0.0
  %192 = vmatprep.subr.mxu0 0.0
  %193 = vmatpush1.msra.mxu0 0.0
  %194 = vmatprep.subr.mxu0 0.0
  %195 = vmatpush1.msra.mxu0 0.0
  %196 = vmatprep.subr.mxu0 0.0
  %197 = vmatpush1.msra.mxu0 0.0
  %198 = vmatprep.subr.mxu0 0.0
  %199 = vmatpush1.msra.mxu0 0.0
  %200 = vmatprep.subr.mxu0 0.0
  %201 = vmatpush1.msra.mxu0 0.0
  %202 = vmatprep.subr.mxu0 0.0
  %203 = vmatpush1.msra.mxu0 0.0
  %204 = vmatprep.subr.mxu0 0.0
  %205 = vmatpush1.msra.mxu0 0.0
  %206 = vmatprep.subr.mxu0 0.0
  %207 = vmatpush1.msra.mxu0 0.0
  %208 = vmatprep.subr.mxu0 0.0
  %209 = vmatpush1.msra.mxu0 0.0
  %210 = vmatprep.mubr.f32.mxu0 %v135
  %211 = vmatmul.mubr.f32.gmra.mrb[0].mxu0 %v78
  %v212 = vpop.f32.mrb[0].mxu0
  %v213 = vadd.f32 %v127, %v212
  %v214 = vpop.f32.mrb[0].mxu0
  %v215 = vadd.f32 %v131, %v214
  %216 = vmatprep.mubr.f32.mxu0 %v138
  %217 = vmatmul.mubr.f32.gmra.mrb[0].mxu0 %v80
  %v218 = vpop.f32.mrb[0].mxu0
  %v219 = vadd.f32 %v127, %v218
  %v220 = vpop.f32.mrb[0].mxu0
  %v221 = vadd.f32 %v131, %v220
  %222 = vmatprep.mubr.f32.mxu0 %v141
  %223 = vmatmul.mubr.f32.gmra.mrb[0].mxu0 %v82
  %v224 = vpop.f32.mrb[0].mxu0
  %v225 = vadd.f32 %v127, %v224
  %v226 = vpop.f32.mrb[0].mxu0
  %v227 = vadd.f32 %v131, %v226
  %228 = vmatprep.mubr.f32.mxu0 %v144
  %229 = vmatmul.mubr.f32.gmra.mrb[0].mxu0 %v84
  %v230 = vpop.f32.mrb[0].mxu0
  %v231 = vadd.f32 %v127, %v230
  %v232 = vpop.f32.mrb[0].mxu0
  %v233 = vadd.f32 %v131, %v232
  %234 = vdwg.mxu0
  %v235 = vmax.f32 %v213, %v215
  %v236 = vmax.f32 %v219, %v221
  %v237 = vmax.f32 %v225, %v227
  %v238 = vmax.f32 %v231, %v233
  %v243 = vcombine.high %v235, %v235
  %v245 = vunpack.c.l.s4 1983009808
  %v246 = vunpack.c.0.s8 %v245
  %v247 = vlaneseq
  %v248 = vshrl.u32 %v247, 7
  %v249 = vsub.s32 %v246, %v248
  %v250 = vrot.slane %v235, %v249
  %v252 = vunpack.c.l.s4 1983009808
  %v253 = vunpack.c.0.s8 %v252
  %v254 = vlaneseq
  %v255 = vshrl.u32 %v254, 7
  %v256 = vsub.s32 %v253, %v255
  %v257 = vrot.slane %v243, %v256
  %v258 = vcombine.high %v250, %v250
  %v259 = vcombine.high %v257, %v257
  %v260 = vcombine.high %v236, %v236
  %v262 = vunpack.c.l.s4 1983009808
  %v263 = vunpack.c.0.s8 %v262
  %v264 = vlaneseq
  %v265 = vshrl.u32 %v264, 7
  %v266 = vsub.s32 %v263, %v265
  %v267 = vrot.slane %v236, %v266
  %v269 = vunpack.c.l.s4 1983009808
  %v270 = vunpack.c.0.s8 %v269
  %v271 = vlaneseq
  %v272 = vshrl.u32 %v271, 7
  %v273 = vsub.s32 %v270, %v272
  %v274 = vrot.slane %v260, %v273
  %v275 = vcombine.high %v267, %v267
  %v276 = vcombine.high %v274, %v274
  %v277 = vcombine.high %v237, %v237
  %v279 = vunpack.c.l.s4 1983009808
  %v280 = vunpack.c.0.s8 %v279
  %v281 = vlaneseq
  %v282 = vshrl.u32 %v281, 7
  %v283 = vsub.s32 %v280, %v282
  %v284 = vrot.slane %v237, %v283
  %v286 = vunpack.c.l.s4 1983009808
  %v287 = vunpack.c.0.s8 %v286
  %v288 = vlaneseq
  %v289 = vshrl.u32 %v288, 7
  %v290 = vsub.s32 %v287, %v289
  %v291 = vrot.slane %v277, %v290
  %v292 = vcombine.high %v284, %v284
  %v293 = vcombine.high %v291, %v291
  %v294 = vcombine.high %v238, %v238
  %v296 = vunpack.c.l.s4 1983009808
  %v297 = vunpack.c.0.s8 %v296
  %v298 = vlaneseq
  %v299 = vshrl.u32 %v298, 7
  %v300 = vsub.s32 %v297, %v299
  %v301 = vrot.slane %v238, %v300
  %v303 = vunpack.c.l.s4 1983009808
  %v304 = vunpack.c.0.s8 %v303
  %v305 = vlaneseq
  %v306 = vshrl.u32 %v305, 7
  %v307 = vsub.s32 %v304, %v306
  %v308 = vrot.slane %v294, %v307
  %v309 = vcombine.high %v301, %v301
  %v310 = vcombine.high %v308, %v308
  %v327 = vrot.slane %v250, 7
  %v328 = vrot.slane %v327, 2
  %v329 = vrot.slane %v258, 7
  %v330 = vrot.slane %v329, 2
  %v331 = vrot.slane %v257, 7
  %v332 = vrot.slane %v331, 2
  %v333 = vrot.slane %v259, 7
  %v334 = vrot.slane %v333, 2
  %v335 = vrot.slane %v267, 7
  %v336 = vrot.slane %v335, 2
  %v337 = vrot.slane %v275, 7
  %v338 = vrot.slane %v337, 2
  %v339 = vrot.slane %v274, 7
  %v340 = vrot.slane %v339, 2
  %v341 = vrot.slane %v276, 7
  %v342 = vrot.slane %v341, 2
  %v343 = vrot.slane %v284, 7
  %v344 = vrot.slane %v343, 2
  %v345 = vrot.slane %v292, 7
  %v346 = vrot.slane %v345, 2
  %v347 = vrot.slane %v291, 7
  %v348 = vrot.slane %v347, 2
  %v349 = vrot.slane %v293, 7
  %v350 = vrot.slane %v349, 2
  %v351 = vrot.slane %v301, 7
  %v352 = vrot.slane %v351, 2
  %v353 = vrot.slane %v309, 7
  %v354 = vrot.slane %v353, 2
  %v355 = vrot.slane %v308, 7
  %v356 = vrot.slane %v355, 2
  %v357 = vrot.slane %v310, 7
  %v358 = vrot.slane %v357, 2
  %v375 = vmax.f32 %v250, %v328
  %v376 = vmax.f32 %v258, %v330
  %v377 = vmax.f32 %v257, %v332
  %v378 = vmax.f32 %v259, %v334
  %v379 = vmax.f32 %v267, %v336
  %v380 = vmax.f32 %v275, %v338
  %v381 = vmax.f32 %v274, %v340
  %v382 = vmax.f32 %v276, %v342
  %v383 = vmax.f32 %v284, %v344
  %v384 = vmax.f32 %v292, %v346
  %v385 = vmax.f32 %v291, %v348
  %v386 = vmax.f32 %v293, %v350
  %v387 = vmax.f32 %v301, %v352
  %v388 = vmax.f32 %v309, %v354
  %v389 = vmax.f32 %v308, %v356
  %v390 = vmax.f32 %v310, %v358
  %v407 = vlaneseq
  %v408 = vshrl.u32 %v407, 7
  %v409 = vsub.s32 0, %v408
  %v410 = vrot.slane %v375, %v409
  %v411 = vlaneseq
  %v412 = vshrl.u32 %v411, 7
  %v413 = vsub.s32 0, %v412
  %v414 = vrot.slane %v376, %v413
  %v415 = vlaneseq
  %v416 = vshrl.u32 %v415, 7
  %v417 = vsub.s32 0, %v416
  %v418 = vrot.slane %v377, %v417
  %v419 = vlaneseq
  %v420 = vshrl.u32 %v419, 7
  %v421 = vsub.s32 0, %v420
  %v422 = vrot.slane %v378, %v421
  %v423 = vlaneseq
  %v424 = vshrl.u32 %v423, 7
  %v425 = vsub.s32 0, %v424
  %v426 = vrot.slane %v379, %v425
  %v427 = vlaneseq
  %v428 = vshrl.u32 %v427, 7
  %v429 = vsub.s32 0, %v428
  %v430 = vrot.slane %v380, %v429
  %v431 = vlaneseq
  %v432 = vshrl.u32 %v431, 7
  %v433 = vsub.s32 0, %v432
  %v434 = vrot.slane %v381, %v433
  %v435 = vlaneseq
  %v436 = vshrl.u32 %v435, 7
  %v437 = vsub.s32 0, %v436
  %v438 = vrot.slane %v382, %v437
  %v439 = vlaneseq
  %v440 = vshrl.u32 %v439, 7
  %v441 = vsub.s32 0, %v440
  %v442 = vrot.slane %v383, %v441
  %v443 = vlaneseq
  %v444 = vshrl.u32 %v443, 7
  %v445 = vsub.s32 0, %v444
  %v446 = vrot.slane %v384, %v445
  %v447 = vlaneseq
  %v448 = vshrl.u32 %v447, 7
  %v449 = vsub.s32 0, %v448
  %v450 = vrot.slane %v385, %v449
  %v451 = vlaneseq
  %v452 = vshrl.u32 %v451, 7
  %v453 = vsub.s32 0, %v452
  %v454 = vrot.slane %v386, %v453
  %v455 = vlaneseq
  %v456 = vshrl.u32 %v455, 7
  %v457 = vsub.s32 0, %v456
  %v458 = vrot.slane %v387, %v457
  %v459 = vlaneseq
  %v460 = vshrl.u32 %v459, 7
  %v461 = vsub.s32 0, %v460
  %v462 = vrot.slane %v388, %v461
  %v463 = vlaneseq
  %v464 = vshrl.u32 %v463, 7
  %v465 = vsub.s32 0, %v464
  %v466 = vrot.slane %v389, %v465
  %v467 = vlaneseq
  %v468 = vshrl.u32 %v467, 7
  %v469 = vsub.s32 0, %v468
  %v470 = vrot.slane %v390, %v469
  %vm471 = vcmask 1041409
  %v472 = vsel %vm471, %v414, %v410
  %vm473 = vcmask 1042434
  %v474 = vsel %vm473, %v418, %v472
  %vm475 = vcmask 1043459
  %v476 = vsel %vm475, %v422, %v474
  %vm477 = vcmask 1044484
  %v478 = vsel %vm477, %v426, %v476
  %vm479 = vcmask 1045509
  %v480 = vsel %vm479, %v430, %v478
  %vm481 = vcmask 1046534
  %v482 = vsel %vm481, %v434, %v480
  %vm483 = vcmask 1047559
  %v484 = vsel %vm483, %v438, %v482
  %v485 = vsel %vm471, %v446, %v442
  %v486 = vsel %vm473, %v450, %v485
  %v487 = vsel %vm475, %v454, %v486
  %v488 = vsel %vm477, %v458, %v487
  %v489 = vsel %vm479, %v462, %v488
  %v490 = vsel %vm481, %v466, %v489
  %v491 = vsel %vm483, %v470, %v490
  %494 = vst [vmem:[%s3] sm:$0xff] %v484
  %495 = vst [vmem:[%s3 + $0x8] sm:$0xff] %v491
  // Predicated region
  $region14: #{forward.1} parent=0 // pred_check
    _
  $region15: #{forward.1} parent=0 // pred_check_branch
    %497 = sbr.rel (0) target = $region17
  $region16: #{forward.1} parent=0 // pred_region
    _
  $region17: #{forward.1} parent=0 // pred_fallthru
    _
  // Predicated region
  $region18: #{forward.1} parent=0 // pred_check
    _
  $region19: #{forward.1} parent=0 // pred_check_branch
    %499 = sbr.rel (0) target = $region21
  $region20: #{forward.1} parent=0 // pred_region
    _
  $region21: #{forward.1} parent=0 // pred_fallthru
    _

</llo_original>
